<compile_context>
chip_gen: v6e
topology: v6e:2x2x1
jax: 0.10.0
libtpu: 0.0.40
codegen_flags: <defaults>
</compile_context>

<pallas_src>
import numpy as np
import jax
import jax.numpy as jnp
from jax import lax
from jax.experimental import pallas as pl
from jax.experimental.pallas import tpu as pltpu


# ----------------- generic tiled matmul + bias (single K block) --------------
def matmul_bias_kernel(x_ref, w_ref, b_ref, o_ref):
    o_ref[...] = (
        jnp.dot(x_ref[...], w_ref[...], preferred_element_type=jnp.float32)
        + b_ref[...]
    ).astype(o_ref.dtype)


def matmul_bias_pallas(x_bf16, w_bf16, b_f32, *, out_dtype=jnp.float32,
                       tm=None, tn=None):
    """(M, K) @ (K, N) + b -> (M, N).  K is kept whole (tk = K): no accumulator
    scratch, no K grid axis, no init/finalize predicates.
    # TODO(synk): add a K-tiled accumulator variant for very large K."""
    M, K = x_bf16.shape
    Kw, N = w_bf16.shape
    assert K == Kw and N % 128 == 0
    if tn is None:
        tn = 512 if N % 512 == 0 else (256 if N % 256 == 0 else 128)
    if tm is None:
        tm = 256 if M % 256 == 0 else 128
    m_pad = pl.cdiv(M, tm) * tm
    if m_pad != M:
        x_bf16 = jnp.pad(x_bf16, ((0, m_pad - M), (0, 0)))

    grid_spec = pltpu.PrefetchScalarGridSpec(
        num_scalar_prefetch=0,
        grid=(m_pad // tm, N // tn),
        in_specs=[
            pl.BlockSpec((tm, K), lambda i, j: (i, 0)),
            pl.BlockSpec((K, tn), lambda i, j: (0, j)),
            pl.BlockSpec((1, tn), lambda i, j: (0, j)),
        ],
        out_specs=pl.BlockSpec((tm, tn), lambda i, j: (i, j)),
    )
    out = pl.pallas_call(
        matmul_bias_kernel,
        out_shape=jax.ShapeDtypeStruct((m_pad, N), out_dtype),
        grid_spec=grid_spec,
        compiler_params=pltpu.CompilerParams(
            dimension_semantics=("parallel", "parallel")),
    )(x_bf16, w_bf16, b_f32)
    return out[:M]


# ------------------- recurrent LSTM kernel (time loop in VMEM) ---------------
def lstm_seq_kernel(gx_ref, whh_ref, h_out_ref, h_scr, c_scr):
    """Whole-sequence LSTM with the input projection precomputed.

    gx_ref   : (T1, Bb, 4H) f32   x_t @ W_ih^T + (b_ih+b_hh), time-major
    whh_ref  : (H, 4H)      bf16  W_hh^T (gate order i, f, g, o)
    h_out_ref: (T1, Bb, H)  bf16  h_t for every step
    h_scr/c_scr: (Bb, H)    f32   carried LSTM state
    """
    H = h_scr.shape[1]
    T1 = gx_ref.shape[0]

    h_scr[...] = jnp.zeros_like(h_scr)
    c_scr[...] = jnp.zeros_like(c_scr)

    def step(t, carry):
        # only the recurrent half of the gates is computed per step
        gates = gx_ref[t] + jnp.dot(
            h_scr[...].astype(whh_ref.dtype), whh_ref[...],
            preferred_element_type=jnp.float32)                 # (Bb, 4H) f32

        i_g = jax.nn.sigmoid(gates[:, 0:H])
        f_g = jax.nn.sigmoid(gates[:, H:2 * H])
        g_g = jnp.tanh(gates[:, 2 * H:3 * H])
        o_g = jax.nn.sigmoid(gates[:, 3 * H:4 * H])

        c_new = f_g * c_scr[...] + i_g * g_g
        h_new = o_g * jnp.tanh(c_new)
        c_scr[...] = c_new
        h_scr[...] = h_new
        h_out_ref[t] = h_new.astype(h_out_ref.dtype)
        return carry

    # short fixed trip count: fully unrolled for cross-iteration scheduling
    lax.fori_loop(0, T1, step, None, unroll=True)


def _num_batch_blocks(B):
    """v7x has 2 TensorCores/chip: split the (independent per batch row)
    recurrence across them via a 'parallel' batch grid axis.  On 1-TC chips
    (v5e/v6e) keep a single block — extra blocks only serialize the
    latency-bound loop."""
    try:
        kind = jax.devices()[0].device_kind.lower()
    except Exception:
        kind = ""
    if "v7" in kind and B % 16 == 0:
        return 2
    return 1


def lstm_pallas(gates_x_f32, w_hh_bf16, *, batch_blocks=None):
    """Returns h_t for every time step: (T+1, B, H) bfloat16."""
    T1, B, G = gates_x_f32.shape
    H = G // 4
    if batch_blocks is None:
        batch_blocks = _num_batch_blocks(B)
    block_b = B // batch_blocks
    if batch_blocks > 1 and block_b % 8 != 0:       # respect (8,128) tiling
        batch_blocks, block_b = 1, B

    grid_spec = pltpu.PrefetchScalarGridSpec(
        num_scalar_prefetch=0,
        grid=(batch_blocks,),
        in_specs=[
            pl.BlockSpec((T1, block_b, 4 * H), lambda b: (0, b, 0)),
            pl.BlockSpec((H, 4 * H), lambda b: (0, 0)),
        ],
        out_specs=pl.BlockSpec((T1, block_b, H), lambda b: (0, b, 0)),
        scratch_shapes=[
            pltpu.VMEM((block_b, H), jnp.float32),   # h carry
            pltpu.VMEM((block_b, H), jnp.float32),   # c carry
        ],
    )
    # TODO(synk): at production T/B/H, set pipeline_mode=pl.Buffered(1) on the
    # full-resident specs (or size vmem_limit_bytes) so the resident footprint
    # fits v7x's 64 MiB VMEM, and fall back to a time grid / emit_pipeline if
    # the whole sequence no longer fits.
    return pl.pallas_call(
        lstm_seq_kernel,
        out_shape=jax.ShapeDtypeStruct((T1, B, H), jnp.bfloat16),
        grid_spec=grid_spec,
        compiler_params=pltpu.CompilerParams(
            dimension_semantics=("parallel",)),
    )(gates_x_f32, w_hh_bf16)


# ----------------------------- full forward pass -----------------------------
def captioning_forward(features, captions, lengths_host, params):
    """Mirrors CaptioningModel.forward.

    features : (B, E) float32
    captions : (B, T) int32 token ids
    lengths_host : python list of ints, sorted descending (pack_padded_sequence
                   enforce_sorted=True), lengths over the T+1 sequence.
    returns  : (sum(lengths), vocab_size) float32  ==  fc(hiddens[0])
    """
    emb_table = params["emb_table"]
    w_ih_t, w_hh_t, bias = params["w_ih_t"], params["w_hh_t"], params["bias"]
    w_fc_t, b_fc = params["w_fc_t"], params["b_fc"]

    B, T = captions.shape
    E = emb_table.shape[1]
    H = w_hh_t.shape[0]
    T1 = T + 1

    # glue: embedding gather + prepend image features, time-major, bf16 MXU feed
    word_emb = jnp.take(emb_table, captions, axis=0)                  # (B,T,E)
    seq = jnp.concatenate([features[:, None, :], word_emb], axis=1)   # (B,T+1,E)
    seq_tbe = jnp.transpose(seq, (1, 0, 2)).astype(jnp.bfloat16)      # (T+1,B,E)

    # (1) hoisted input projection + bias: one large MXU matmul over T1*B rows
    gx = matmul_bias_pallas(seq_tbe.reshape(T1 * B, E), w_ih_t, bias,
                            out_dtype=jnp.float32)                    # (T1*B,4H)
    gx = gx.reshape(T1, B, 4 * H)

    # (2) recurrent Pallas kernel: only h_prev @ W_hh^T per step
    h_tbh = lstm_pallas(gx, w_hh_t)                                   # (T+1,B,H)

    # (3) pack_padded_sequence row order; indices pre-padded to the FC row tile
    #     (single gather straight to the padded slab — no jnp.pad pass).
    # TODO(synk): for large sum(L)/H, fuse this gather into the FC DMA via
    # scalar-prefetched row indices instead of an XLA gather.
    lengths_np = np.asarray(lengths_host, dtype=np.int64)
    t_max = int(lengths_np.max())
    active = lengths_np[None, :] > np.arange(t_max)[:, None]          # (Tmax,B)
    t_idx_np, b_idx_np = np.nonzero(active)                           # packed order
    n_rows = int(t_idx_np.shape[0])
    tm_fc = 256 if n_rows > 128 else 128
    m_pad = pl.cdiv(n_rows, tm_fc) * tm_fc
    pad = m_pad - n_rows
    t_idx = jnp.asarray(np.concatenate([t_idx_np, np.zeros(pad, np.int64)]),
                        dtype=jnp.int32)
    b_idx = jnp.asarray(np.concatenate([b_idx_np, np.zeros(pad, np.int64)]),
                        dtype=jnp.int32)
    h_rows = h_tbh[t_idx, b_idx]                                      # (m_pad,H)

    # (4) vocab FC: one big tiled matmul over the packed rows
    # TODO(synk): on v5e pass out_dtype=jnp.bfloat16 to halve the logits
    # writeback; on v7x consider fp8 W_fc with per-column scales (+ validation).
    logits = matmul_bias_pallas(h_rows, w_fc_t, b_fc, tm=tm_fc,
                                out_dtype=jnp.float32)
    return logits[:n_rows]                                            # (sumL, V)


# ------------------------------- parameters ----------------------------------
def init_params(key, embed_size, hidden_size, vocab_size):
    k = jax.random.split(key, 7)
    H, E, V = hidden_size, embed_size, vocab_size
    # stand-in for the pretrained glove embedding table (V, E)
    emb_table = jax.random.normal(k[0], (V, E), jnp.float32) * 0.1
    # LSTM weights, PyTorch layout (4H, E) / (4H, H), gate order i,f,g,o
    w_ih = jax.random.normal(k[1], (4 * H, E), jnp.float32) * 0.1
    w_hh = jax.random.normal(k[2], (4 * H, H), jnp.float32) * 0.1
    b_ih = jax.random.normal(k[3], (4 * H,), jnp.float32) * 0.1
    b_hh = jax.random.normal(k[4], (4 * H,), jnp.float32) * 0.1
    # Linear: weight (V, H), bias (V)
    w_fc = jax.random.normal(k[5], (V, H), jnp.float32) * 0.1
    b_fc = jax.random.normal(k[6], (V,), jnp.float32) * 0.1

    params = dict(
        emb_table=emb_table,
        w_ih_t=w_ih.T.astype(jnp.bfloat16),          # (E, 4H) bf16
        w_hh_t=w_hh.T.astype(jnp.bfloat16),          # (H, 4H) bf16
        bias=(b_ih + b_hh).reshape(1, 4 * H),        # f32, folded into x-proj
        w_fc_t=w_fc.T.astype(jnp.bfloat16),          # (H, V) bf16
        b_fc=b_fc.reshape(1, V),                     # f32
    )
    ref_params = dict(emb_table=emb_table, w_ih=w_ih, w_hh=w_hh,
                      b_ih=b_ih, b_hh=b_hh, w_fc=w_fc, b_fc=b_fc)
    return params, ref_params


# ------------------------- pure-JAX f32 reference ----------------------------
def reference_forward(features, captions, lengths_host, rp):
    emb = jnp.take(rp["emb_table"], captions, axis=0)
    seq = jnp.concatenate([features[:, None, :], emb], axis=1)        # (B,T1,E)
    B = seq.shape[0]
    H = rp["w_hh"].shape[1]

    def step(carry, x_t):
        h, c = carry
        gates = (x_t @ rp["w_ih"].T + rp["b_ih"]
                 + h @ rp["w_hh"].T + rp["b_hh"])
        i = jax.nn.sigmoid(gates[:, 0:H])
        f = jax.nn.sigmoid(gates[:, H:2 * H])
        g = jnp.tanh(gates[:, 2 * H:3 * H])
        o = jax.nn.sigmoid(gates[:, 3 * H:4 * H])
        c = f * c + i * g
        h = o * jnp.tanh(c)
        return (h, c), h

    init = (jnp.zeros((B, H), jnp.float32), jnp.zeros((B, H), jnp.float32))
    _, hs = lax.scan(step, init, jnp.transpose(seq, (1, 0, 2)))       # (T1,B,H)

    lengths_np = np.asarray(lengths_host, dtype=np.int64)
    active = lengths_np[None, :] > np.arange(int(lengths_np.max()))[:, None]
    t_idx, b_idx = np.nonzero(active)
    h_packed = hs[t_idx, b_idx]
    return h_packed @ rp["w_fc"].T + rp["b_fc"]


if __name__ == "__main__":
    # lane/sublane-aligned small shapes: E, H, V multiples of 128; B multiple of 16
    EMBED, HIDDEN, VOCAB = 128, 128, 256
    B, T = 16, 7                             # captions length T, sequence T+1
    lengths_host = [8, 8, 7, 7, 6, 6, 5, 5, 4, 4, 3, 3, 2, 2, 2, 1]

    key = jax.random.PRNGKey(0)
    kf, kc, kp = jax.random.split(key, 3)

    features = jax.random.normal(kf, (B, EMBED), jnp.float32)
    captions = jax.random.randint(kc, (B, T), 0, VOCAB, dtype=jnp.int32)
    params, ref_params = init_params(kp, EMBED, HIDDEN, VOCAB)

    out = captioning_forward(features, captions, lengths_host, params)
    jax.block_until_ready(out)
    assert out.shape == (sum(lengths_host), VOCAB)

    # tolerance check vs f32 reference (bf16 MXU feed + 8-step recurrence drift)
    ref = reference_forward(features, captions, lengths_host, ref_params)
    np.testing.assert_allclose(np.asarray(out), np.asarray(ref),
                               rtol=1e-1, atol=1.5e-1)
    print("KERNEL_OK")
</pallas_src>

<mosaic_0001>
module attributes {stable_mosaic.version = 11 : i64} {
  func.func @matmul_bias_kernel(%arg0: i32, %arg1: i32, %arg2: memref<128x128xbf16, #tpu.memory_space<vmem>>, %arg3: memref<128x512xbf16, #tpu.memory_space<vmem>>, %arg4: memref<1x512xf32, #tpu.memory_space<vmem>>, %arg5: memref<128x512xf32, #tpu.memory_space<vmem>>) attributes {dimension_semantics = [#tpu.dimension_semantics<parallel>, #tpu.dimension_semantics<parallel>], iteration_bounds = array<i64: 1, 1>, scalar_prefetch = 0 : i64, scratch_operands = 0 : i64, tpu.core_type = #tpu.core_type<tc>, window_params = [{transform_indices = @transform_0, window_bounds = array<i64: 128, 128>}, {transform_indices = @transform_1, window_bounds = array<i64: 128, 512>}, {transform_indices = @transform_2, window_bounds = array<i64: 1, 512>}, {transform_indices = @transform_3, window_bounds = array<i64: 128, 512>}]} {
    %c0 = arith.constant 0 : index
    %c0_0 = arith.constant 0 : index
    %0 = vector.load %arg2[%c0, %c0_0] : memref<128x128xbf16, #tpu.memory_space<vmem>>, vector<128x128xbf16>
    %c0_1 = arith.constant 0 : index
    %c0_2 = arith.constant 0 : index
    %1 = vector.load %arg3[%c0_1, %c0_2] : memref<128x512xbf16, #tpu.memory_space<vmem>>, vector<128x512xbf16>
    %cst = arith.constant dense<0.000000e+00> : vector<128x512xf32>
    %2 = tpu.matmul %0, %1, %cst {dimension_numbers = #tpu.dot_dimension_numbers<[1], [0], [0], [1], [0, 0, 1, 1], [], []>} : vector<128x128xbf16>, vector<128x512xbf16>, vector<128x512xf32> -> vector<128x512xf32>
    %c0_3 = arith.constant 0 : index
    %c0_4 = arith.constant 0 : index
    %3 = vector.load %arg4[%c0_3, %c0_4] : memref<1x512xf32, #tpu.memory_space<vmem>>, vector<1x512xf32>
    %4 = vector.broadcast %3 : vector<1x512xf32> to vector<128x512xf32>
    %5 = arith.addf %2, %4 : vector<128x512xf32>
    %c0_5 = arith.constant 0 : index
    %c0_6 = arith.constant 0 : index
    %6 = vector.load %arg5[%c0_5, %c0_6] : memref<128x512xf32, #tpu.memory_space<vmem>>, vector<128x512xf32>
    tpu.vector_store %arg5[%c0_5, %c0_6], %5 {strides = array<i32>} : memref<128x512xf32, #tpu.memory_space<vmem>>, vector<128x512xf32>,
    return
  }
  func.func @transform_0(%arg0: i32, %arg1: i32) -> (i32, i32) {
    %c0_i32 = arith.constant 0 : i32
    %c0_i32_0 = arith.constant 0 : i32
    return %arg0, %c0_i32 : i32, i32
  }
  func.func @transform_1(%arg0: i32, %arg1: i32) -> (i32, i32) {
    %c0_i32 = arith.constant 0 : i32
    %c0_i32_0 = arith.constant 0 : i32
    return %c0_i32, %arg1 : i32, i32
  }
  func.func @transform_2(%arg0: i32, %arg1: i32) -> (i32, i32) {
    %c0_i32 = arith.constant 0 : i32
    %c0_i32_0 = arith.constant 0 : i32
    return %c0_i32, %arg1 : i32, i32
  }
  func.func @transform_3(%arg0: i32, %arg1: i32) -> (i32, i32) {
    %c0_i32 = arith.constant 0 : i32
    return %arg0, %arg1 : i32, i32
  }
}

</mosaic_0001>

<llo_original>
// kernel: tpu_custom_call.1
$region0: #{tpu_custom_call.1}
  #allocation0 [shape = 'u32[]', space=smem, size = 0x4, offset = 0x4, fixed_abs, tag = 'smem constant byte address 0x4 - core index']
  #allocation1 [shape = 'u32[144,128]{1,0:T(1,128)}', space=vmem, size = 0x12000, scoped, tag = 'internal scratch']
  %s0 = inlined_call_operand.hbm [shape: bf16[128,128], index: 0, kind: input, shape index: {}]
  %s1 = inlined_call_operand.hbm [shape: bf16[128,512], index: 1, kind: input, shape index: {}]
  %s2 = inlined_call_operand.hbm [shape: f32[1,512], index: 2, kind: input, shape index: {}]
  %s3 = inlined_call_operand.hbm [shape: f32[128,512], index: 3, kind: output, shape index: {}]
  %s4 = sld [smem:[#allocation0]]
  $region34: #{tpu_custom_call.1} parent=0
    _
  %s6 = ssub.s32 1, %s4
  %s7 = scalar_select 0, %s6, %s4
  $region1: #{tpu_custom_call.1} parent=0
    #allocation2 [shape = 'u8[32768]{0}', space=vmem, size = 0x8000, scoped, tag = 'input window, operand 0, single buffered']
    #allocation3 [shape = 's32[1]{0}', space=sflag, size = 0x4, scoped, tag = 'scoped memory for tpu_custom_call.1']
    #allocation4 [shape = 's32[1]{0}', space=sflag, size = 0x4, scoped, tag = 'scoped memory for tpu_custom_call.1']
    #allocation5 [shape = 'u8[131072]{0}', space=vmem, size = 0x20000, scoped, tag = 'input window, operand 1, single buffered']
    #allocation6 [shape = 's32[1]{0}', space=sflag, size = 0x4, scoped, tag = 'scoped memory for tpu_custom_call.1']
    #allocation7 [shape = 'u8[2048]{0}', space=vmem, size = 0x800, scoped, tag = 'input window, operand 2, single buffered']
    #allocation8 [shape = 'u8[262144]{0}', space=vmem, size = 0x40000, scoped, tag = 'output window, operand 0, single buffered']
    %8 = vsyncpa [#allocation3], 0
    %9 = vsyncpa [#allocation6], 0
    %10 = vsyncpa [#allocation4], 0
    // Predicated region
    $region2: #{tpu_custom_call.1} parent=1 // pred_check
      _
    $region3: #{tpu_custom_call.1} parent=1 // pred_check_branch
      %12 = sbr.rel (0) target = $region5
    $region4: #{tpu_custom_call.1} parent=1 // pred_region
      %s14 = ssub.s32 1024, 1024
      %15 = vsyncadd [#allocation3], %s14
      %s16 = sshll.u32 [#allocation2], 4
      %s17 = int_to_ptr.vmem [resolvable:$true] %s16
      %22 = dma.hbm_to_vmem [thread:$0]  %s0, 1024, %s17, [#allocation3], 64, 64, 4
    $region5: #{tpu_custom_call.1} parent=1 // pred_fallthru
      _
    // Predicated region
    $region6: #{tpu_custom_call.1} parent=1 // pred_check
      _
    $region7: #{tpu_custom_call.1} parent=1 // pred_check_branch
      %24 = sbr.rel (0) target = $region9
    $region8: #{tpu_custom_call.1} parent=1 // pred_region
      %s26 = ssub.s32 4096, 4096
      %27 = vsyncadd [#allocation6], %s26
      %s28 = sshll.u32 [#allocation5], 4
      %s29 = int_to_ptr.vmem [resolvable:$true] %s28
      %34 = dma.hbm_to_vmem [thread:$0]  %s1, 4096, %s29, [#allocation6], 256, 256, 16
    $region9: #{tpu_custom_call.1} parent=1 // pred_fallthru
      _
    // Predicated region
    $region10: #{tpu_custom_call.1} parent=1 // pred_check
      _
    $region11: #{tpu_custom_call.1} parent=1 // pred_check_branch
      %36 = sbr.rel (0) target = $region13
    $region12: #{tpu_custom_call.1} parent=1 // pred_region
      %s38 = ssub.s32 64, 64
      %39 = vsyncadd [#allocation6], %s38
      %s41 = sshll.u32 [#allocation7], 4
      %s42 = int_to_ptr.vmem [resolvable:$true] %s41
      %44 = dma.hbm_to_vmem [thread:$0]  %s2, 64, %s42, [#allocation6]
    $region13: #{tpu_custom_call.1} parent=1 // pred_fallthru
      _
    // Predicated region
    $region14: #{tpu_custom_call.1} parent=1 // pred_check
      _
    $region15: #{tpu_custom_call.1} parent=1 // pred_check_branch
      %46 = sbr.rel (0) target = $region17
    $region16: #{tpu_custom_call.1} parent=1 // pred_region
      %47 = dma.done [#allocation3], 1024
    $region17: #{tpu_custom_call.1} parent=1 // pred_fallthru
      _
    // Predicated region
    $region18: #{tpu_custom_call.1} parent=1 // pred_check
      _
    $region19: #{tpu_custom_call.1} parent=1 // pred_check_branch
      %49 = sbr.rel (0) target = $region21
    $region20: #{tpu_custom_call.1} parent=1 // pred_region
      %50 = dma.done [#allocation6], 4096
    $region21: #{tpu_custom_call.1} parent=1 // pred_fallthru
      _
    // Predicated region
    $region22: #{tpu_custom_call.1} parent=1 // pred_check
      _
    $region23: #{tpu_custom_call.1} parent=1 // pred_check_branch
      %52 = sbr.rel (0) target = $region25
    $region24: #{tpu_custom_call.1} parent=1 // pred_region
      %53 = dma.done [#allocation6], 64
    $region25: #{tpu_custom_call.1} parent=1 // pred_fallthru
      _
    %v55 = vld [vmem:[#allocation2] sm:$0xf]
    %v56 = vld [vmem:[#allocation2 + $0x4] sm:$0xf]
    %v57 = vld [vmem:[#allocation2 + $0x8] sm:$0xf]
    %v58 = vld [vmem:[#allocation2 + $0xc] sm:$0xf]
    %v59 = vld [vmem:[#allocation2 + $0x10] sm:$0xf]
    %v60 = vld [vmem:[#allocation2 + $0x14] sm:$0xf]
    %v61 = vld [vmem:[#allocation2 + $0x18] sm:$0xf]
    %v62 = vld [vmem:[#allocation2 + $0x1c] sm:$0xf]
    %v63 = vld [vmem:[#allocation2 + $0x20] sm:$0xf]
    %v64 = vld [vmem:[#allocation2 + $0x24] sm:$0xf]
    %v65 = vld [vmem:[#allocation2 + $0x28] sm:$0xf]
    %v66 = vld [vmem:[#allocation2 + $0x2c] sm:$0xf]
    %v67 = vld [vmem:[#allocation2 + $0x30] sm:$0xf]
    %v68 = vld [vmem:[#allocation2 + $0x34] sm:$0xf]
    %v69 = vld [vmem:[#allocation2 + $0x38] sm:$0xf]
    %v70 = vld [vmem:[#allocation2 + $0x3c] sm:$0xf]
    %v71 = vld [vmem:[#allocation5] sm:$0xff]
    %v72 = vld [vmem:[#allocation5 + $0x8] sm:$0xff]
    %v73 = vld [vmem:[#allocation5 + $0x10] sm:$0xff]
    %v74 = vld [vmem:[#allocation5 + $0x18] sm:$0xff]
    %v75 = vld [vmem:[#allocation5 + $0x20] sm:$0xff]
    %v76 = vld [vmem:[#allocation5 + $0x28] sm:$0xff]
    %v77 = vld [vmem:[#allocation5 + $0x30] sm:$0xff]
    %v78 = vld [vmem:[#allocation5 + $0x38] sm:$0xff]
    %v79 = vld [vmem:[#allocation5 + $0x40] sm:$0xff]
    %v80 = vld [vmem:[#allocation5 + $0x48] sm:$0xff]
    %v81 = vld [vmem:[#allocation5 + $0x50] sm:$0xff]
    %v82 = vld [vmem:[#allocation5 + $0x58] sm:$0xff]
    %v83 = vld [vmem:[#allocation5 + $0x60] sm:$0xff]
    %v84 = vld [vmem:[#allocation5 + $0x68] sm:$0xff]
    %v85 = vld [vmem:[#allocation5 + $0x70] sm:$0xff]
    %v86 = vld [vmem:[#allocation5 + $0x78] sm:$0xff]
    %v87 = vld [vmem:[#allocation5 + $0x80] sm:$0xff]
    %v88 = vld [vmem:[#allocation5 + $0x88] sm:$0xff]
    %v89 = vld [vmem:[#allocation5 + $0x90] sm:$0xff]
    %v90 = vld [vmem:[#allocation5 + $0x98] sm:$0xff]
    %v91 = vld [vmem:[#allocation5 + $0xa0] sm:$0xff]
    %v92 = vld [vmem:[#allocation5 + $0xa8] sm:$0xff]
    %v93 = vld [vmem:[#allocation5 + $0xb0] sm:$0xff]
    %v94 = vld [vmem:[#allocation5 + $0xb8] sm:$0xff]
    %v95 = vld [vmem:[#allocation5 + $0xc0] sm:$0xff]
    %v96 = vld [vmem:[#allocation5 + $0xc8] sm:$0xff]
    %v97 = vld [vmem:[#allocation5 + $0xd0] sm:$0xff]
    %v98 = vld [vmem:[#allocation5 + $0xd8] sm:$0xff]
    %v99 = vld [vmem:[#allocation5 + $0xe0] sm:$0xff]
    %v100 = vld [vmem:[#allocation5 + $0xe8] sm:$0xff]
    %v101 = vld [vmem:[#allocation5 + $0xf0] sm:$0xff]
    %v102 = vld [vmem:[#allocation5 + $0xf8] sm:$0xff]
    %v103 = vld [vmem:[#allocation7] sm:$0xf]
    %v105 = vlaneseq
    %v106 = vshrl.u32 %v105, 7
    %v107 = vsub.s32 0, %v106
    %v108 = vrot.slane %v103, %v107
    %v109 = vlaneseq
    %v110 = vshrl.u32 %v109, 7
    %v111 = vsub.s32 1, %v110
    %v112 = vrot.slane %v103, %v111
    %v113 = vlaneseq
    %v114 = vshrl.u32 %v113, 7
    %v115 = vsub.s32 2, %v114
    %v116 = vrot.slane %v103, %v115
    %v117 = vlaneseq
    %v118 = vshrl.u32 %v117, 7
    %v119 = vsub.s32 3, %v118
    %v120 = vrot.slane %v103, %v119
    %v141 = vunpack.c.l.b16 %v55
    %v142 = vunpack.c.l.b16 %v56
    %v143 = vunpack.c.l.b16 %v57
    %v144 = vunpack.c.l.b16 %v58
    %v145 = vunpack.c.l.b16 %v59
    %v146 = vunpack.c.l.b16 %v60
    %v147 = vunpack.c.l.b16 %v61
    %v148 = vunpack.c.l.b16 %v62
    %v149 = vunpack.c.l.b16 %v63
    %v150 = vunpack.c.l.b16 %v64
    %v151 = vunpack.c.l.b16 %v65
    %v152 = vunpack.c.l.b16 %v66
    %v153 = vunpack.c.l.b16 %v67
    %v154 = vunpack.c.l.b16 %v68
    %v155 = vunpack.c.l.b16 %v69
    %v156 = vunpack.c.l.b16 %v70
    %v157 = vpack.c.b16 %v142, %v141
    %v158 = vpack.c.b16 %v144, %v143
    %v159 = vpack.c.b16 %v146, %v145
    %v160 = vpack.c.b16 %v148, %v147
    %v161 = vpack.c.b16 %v150, %v149
    %v162 = vpack.c.b16 %v152, %v151
    %v163 = vpack.c.b16 %v154, %v153
    %v164 = vpack.c.b16 %v156, %v155
    %v205 = vunpack.c.l.b16 %v71
    %v206 = vunpack.c.h.b16 %v71
    %v207 = vunpack.c.l.b16 %v72
    %v208 = vunpack.c.h.b16 %v72
    %v209 = vunpack.c.l.b16 %v73
    %v210 = vunpack.c.h.b16 %v73
    %v211 = vunpack.c.l.b16 %v74
    %v212 = vunpack.c.h.b16 %v74
    %v213 = vunpack.c.l.b16 %v75
    %v214 = vunpack.c.h.b16 %v75
    %v215 = vunpack.c.l.b16 %v76
    %v216 = vunpack.c.h.b16 %v76
    %v217 = vunpack.c.l.b16 %v77
    %v218 = vunpack.c.h.b16 %v77
    %v219 = vunpack.c.l.b16 %v78
    %v220 = vunpack.c.h.b16 %v78
    %v221 = vunpack.c.l.b16 %v79
    %v222 = vunpack.c.h.b16 %v79
    %v223 = vunpack.c.l.b16 %v80
    %v224 = vunpack.c.h.b16 %v80
    %v225 = vunpack.c.l.b16 %v81
    %v226 = vunpack.c.h.b16 %v81
    %v227 = vunpack.c.l.b16 %v82
    %v228 = vunpack.c.h.b16 %v82
    %v229 = vunpack.c.l.b16 %v83
    %v230 = vunpack.c.h.b16 %v83
    %v231 = vunpack.c.l.b16 %v84
    %v232 = vunpack.c.h.b16 %v84
    %v233 = vunpack.c.l.b16 %v85
    %v234 = vunpack.c.h.b16 %v85
    %v235 = vunpack.c.l.b16 %v86
    %v236 = vunpack.c.h.b16 %v86
    %v237 = vunpack.c.l.b16 %v87
    %v238 = vunpack.c.h.b16 %v87
    %v239 = vunpack.c.l.b16 %v88
    %v240 = vunpack.c.h.b16 %v88
    %v241 = vunpack.c.l.b16 %v89
    %v242 = vunpack.c.h.b16 %v89
    %v243 = vunpack.c.l.b16 %v90
    %v244 = vunpack.c.h.b16 %v90
    %v245 = vunpack.c.l.b16 %v91
    %v246 = vunpack.c.h.b16 %v91
    %v247 = vunpack.c.l.b16 %v92
    %v248 = vunpack.c.h.b16 %v92
    %v249 = vunpack.c.l.b16 %v93
    %v250 = vunpack.c.h.b16 %v93
    %v251 = vunpack.c.l.b16 %v94
    %v252 = vunpack.c.h.b16 %v94
    %v253 = vunpack.c.l.b16 %v95
    %v254 = vunpack.c.h.b16 %v95
    %v255 = vunpack.c.l.b16 %v96
    %v256 = vunpack.c.h.b16 %v96
    %v257 = vunpack.c.l.b16 %v97
    %v258 = vunpack.c.h.b16 %v97
    %v259 = vunpack.c.l.b16 %v98
    %v260 = vunpack.c.h.b16 %v98
    %v261 = vunpack.c.l.b16 %v99
    %v262 = vunpack.c.h.b16 %v99
    %v263 = vunpack.c.l.b16 %v100
    %v264 = vunpack.c.h.b16 %v100
    %v265 = vunpack.c.l.b16 %v101
    %v266 = vunpack.c.h.b16 %v101
    %v267 = vunpack.c.l.b16 %v102
    %v268 = vunpack.c.h.b16 %v102
    %v269 = vpack.c.b16 %v209, %v205
    %v270 = vpack.c.b16 %v210, %v206
    %v271 = vpack.c.b16 %v211, %v207
    %v272 = vpack.c.b16 %v212, %v208
    %v273 = vpack.c.b16 %v217, %v213
    %v274 = vpack.c.b16 %v218, %v214
    %v275 = vpack.c.b16 %v219, %v215
    %v276 = vpack.c.b16 %v220, %v216
    %v277 = vpack.c.b16 %v225, %v221
    %v278 = vpack.c.b16 %v226, %v222
    %v279 = vpack.c.b16 %v227, %v223
    %v280 = vpack.c.b16 %v228, %v224
    %v281 = vpack.c.b16 %v233, %v229
    %v282 = vpack.c.b16 %v234, %v230
    %v283 = vpack.c.b16 %v235, %v231
    %v284 = vpack.c.b16 %v236, %v232
    %v285 = vpack.c.b16 %v241, %v237
    %v286 = vpack.c.b16 %v242, %v238
    %v287 = vpack.c.b16 %v243, %v239
    %v288 = vpack.c.b16 %v244, %v240
    %v289 = vpack.c.b16 %v249, %v245
    %v290 = vpack.c.b16 %v250, %v246
    %v291 = vpack.c.b16 %v251, %v247
    %v292 = vpack.c.b16 %v252, %v248
    %v293 = vpack.c.b16 %v257, %v253
    %v294 = vpack.c.b16 %v258, %v254
    %v295 = vpack.c.b16 %v259, %v255
    %v296 = vpack.c.b16 %v260, %v256
    %v297 = vpack.c.b16 %v265, %v261
    %v298 = vpack.c.b16 %v266, %v262
    %v299 = vpack.c.b16 %v267, %v263
    %v300 = vpack.c.b16 %v268, %v264
    %333 = vmatprep.subr.bf16.mxu0 %v298
    %334 = vmatpush1.bf16.msra.mxu0 %v297
    %335 = vmatprep.subr.bf16.mxu0 %v294
    %336 = vmatpush1.bf16.msra.mxu0 %v293
    %337 = vmatprep.subr.bf16.mxu0 %v290
    %338 = vmatpush1.bf16.msra.mxu0 %v289
    %339 = vmatprep.subr.bf16.mxu0 %v286
    %340 = vmatpush1.bf16.msra.mxu0 %v285
    %341 = vmatprep.subr.bf16.mxu0 %v282
    %342 = vmatpush1.bf16.msra.mxu0 %v281
    %343 = vmatprep.subr.bf16.mxu0 %v278
    %344 = vmatpush1.bf16.msra.mxu0 %v277
    %345 = vmatprep.subr.bf16.mxu0 %v274
    %346 = vmatpush1.bf16.msra.mxu0 %v273
    %347 = vmatprep.subr.bf16.mxu0 %v270
    %348 = vmatpush1.bf16.msra.mxu0 %v269
    %349 = vmatprep.subr.bf16.mxu0 0
    %350 = vmatpush2.bf16.msra.mxu0 0
    %351 = vmatprep.subr.bf16.mxu0 0
    %352 = vmatpush2.bf16.msra.mxu0 0
    %353 = vmatprep.subr.bf16.mxu0 0
    %354 = vmatpush2.bf16.msra.mxu0 0
    %355 = vmatprep.subr.bf16.mxu0 0
    %356 = vmatpush2.bf16.msra.mxu0 0
    %357 = vmatprep.subr.bf16.mxu0 0
    %358 = vmatpush2.bf16.msra.mxu0 0
    %359 = vmatprep.subr.bf16.mxu0 0
    %360 = vmatpush2.bf16.msra.mxu0 0
    %361 = vmatprep.subr.bf16.mxu0 0
    %362 = vmatpush2.bf16.msra.mxu0 0
    %363 = vmatprep.subr.bf16.mxu0 0
    %364 = vmatpush2.bf16.msra.mxu0 0
    %365 = vmatprep.mubr.bf16.mxu0 0
    %366 = vmatmul.mubr.bf16.gmra.mxu0 %v157
    %v367 = vpop.f32.mrf.mxu0
    %v368 = vadd.f32 %v108, %v367
    %v369 = vpop.f32.mrf.mxu0
    %v370 = vadd.f32 %v112, %v369
    %v371 = vpop.f32.mrf.mxu0
    %v372 = vadd.f32 %v108, %v371
    %v373 = vpop.f32.mrf.mxu0
    %v374 = vadd.f32 %v112, %v373
    %375 = vmatprep.mubr.bf16.mxu0 0
    %376 = vmatmul.mubr.bf16.gmra.mxu0 %v158
    %v377 = vpop.f32.mrf.mxu0
    %v378 = vadd.f32 %v108, %v377
    %v379 = vpop.f32.mrf.mxu0
    %v380 = vadd.f32 %v112, %v379
    %v381 = vpop.f32.mrf.mxu0
    %v382 = vadd.f32 %v108, %v381
    %v383 = vpop.f32.mrf.mxu0
    %v384 = vadd.f32 %v112, %v383
    %385 = vmatprep.mubr.bf16.mxu0 0
    %386 = vmatmul.mubr.bf16.gmra.mxu0 %v159
    %v387 = vpop.f32.mrf.mxu0
    %v388 = vadd.f32 %v108, %v387
    %v389 = vpop.f32.mrf.mxu0
    %v390 = vadd.f32 %v112, %v389
    %v391 = vpop.f32.mrf.mxu0
    %v392 = vadd.f32 %v108, %v391
    %v393 = vpop.f32.mrf.mxu0
    %v394 = vadd.f32 %v112, %v393
    %395 = vmatprep.mubr.bf16.mxu0 0
    %396 = vmatmul.mubr.bf16.gmra.mxu0 %v160
    %v397 = vpop.f32.mrf.mxu0
    %v398 = vadd.f32 %v108, %v397
    %v399 = vpop.f32.mrf.mxu0
    %v400 = vadd.f32 %v112, %v399
    %v401 = vpop.f32.mrf.mxu0
    %v402 = vadd.f32 %v108, %v401
    %v403 = vpop.f32.mrf.mxu0
    %v404 = vadd.f32 %v112, %v403
    %405 = vmatprep.mubr.bf16.mxu0 0
    %406 = vmatmul.mubr.bf16.gmra.mxu0 %v161
    %v407 = vpop.f32.mrf.mxu0
    %v408 = vadd.f32 %v108, %v407
    %v409 = vpop.f32.mrf.mxu0
    %v410 = vadd.f32 %v112, %v409
    %v411 = vpop.f32.mrf.mxu0
    %v412 = vadd.f32 %v108, %v411
    %v413 = vpop.f32.mrf.mxu0
    %v414 = vadd.f32 %v112, %v413
    %415 = vmatprep.mubr.bf16.mxu0 0
    %416 = vmatmul.mubr.bf16.gmra.mxu0 %v162
    %v417 = vpop.f32.mrf.mxu0
    %v418 = vadd.f32 %v108, %v417
    %v419 = vpop.f32.mrf.mxu0
    %v420 = vadd.f32 %v112, %v419
    %v421 = vpop.f32.mrf.mxu0
    %v422 = vadd.f32 %v108, %v421
    %v423 = vpop.f32.mrf.mxu0
    %v424 = vadd.f32 %v112, %v423
    %425 = vmatprep.mubr.bf16.mxu0 0
    %426 = vmatmul.mubr.bf16.gmra.mxu0 %v163
    %v427 = vpop.f32.mrf.mxu0
    %v428 = vadd.f32 %v108, %v427
    %v429 = vpop.f32.mrf.mxu0
    %v430 = vadd.f32 %v112, %v429
    %v431 = vpop.f32.mrf.mxu0
    %v432 = vadd.f32 %v108, %v431
    %v433 = vpop.f32.mrf.mxu0
    %v434 = vadd.f32 %v112, %v433
    %435 = vmatprep.mubr.bf16.mxu0 0
    %436 = vmatmul.mubr.bf16.gmra.mxu0 %v164
    %v437 = vpop.f32.mrf.mxu0
    %v438 = vadd.f32 %v108, %v437
    %v439 = vpop.f32.mrf.mxu0
    %v440 = vadd.f32 %v112, %v439
    %v441 = vpop.f32.mrf.mxu0
    %v442 = vadd.f32 %v108, %v441
    %v443 = vpop.f32.mrf.mxu0
    %v444 = vadd.f32 %v112, %v443
    %445 = vdwg.mxu0
    %446 = vmatprep.subr.bf16.mxu0 %v300
    %447 = vmatpush1.bf16.msra.mxu0 %v299
    %448 = vmatprep.subr.bf16.mxu0 %v296
    %449 = vmatpush1.bf16.msra.mxu0 %v295
    %450 = vmatprep.subr.bf16.mxu0 %v292
    %451 = vmatpush1.bf16.msra.mxu0 %v291
    %452 = vmatprep.subr.bf16.mxu0 %v288
    %453 = vmatpush1.bf16.msra.mxu0 %v287
    %454 = vmatprep.subr.bf16.mxu0 %v284
    %455 = vmatpush1.bf16.msra.mxu0 %v283
    %456 = vmatprep.subr.bf16.mxu0 %v280
    %457 = vmatpush1.bf16.msra.mxu0 %v279
    %458 = vmatprep.subr.bf16.mxu0 %v276
    %459 = vmatpush1.bf16.msra.mxu0 %v275
    %460 = vmatprep.subr.bf16.mxu0 %v272
    %461 = vmatpush1.bf16.msra.mxu0 %v271
    %462 = vmatprep.subr.bf16.mxu0 0
    %463 = vmatpush2.bf16.msra.mxu0 0
    %464 = vmatprep.subr.bf16.mxu0 0
    %465 = vmatpush2.bf16.msra.mxu0 0
    %466 = vmatprep.subr.bf16.mxu0 0
    %467 = vmatpush2.bf16.msra.mxu0 0
    %468 = vmatprep.subr.bf16.mxu0 0
    %469 = vmatpush2.bf16.msra.mxu0 0
    %470 = vmatprep.subr.bf16.mxu0 0
    %471 = vmatpush2.bf16.msra.mxu0 0
    %472 = vmatprep.subr.bf16.mxu0 0
    %473 = vmatpush2.bf16.msra.mxu0 0
    %474 = vmatprep.subr.bf16.mxu0 0
    %475 = vmatpush2.bf16.msra.mxu0 0
    %476 = vmatprep.subr.bf16.mxu0 0
    %477 = vmatpush2.bf16.msra.mxu0 0
    %478 = vmatprep.mubr.bf16.mxu0 0
    %479 = vmatmul.mubr.bf16.gmra.mxu0 %v157
    %v480 = vpop.f32.mrf.mxu0
    %v481 = vadd.f32 %v116, %v480
    %v482 = vpop.f32.mrf.mxu0
    %v483 = vadd.f32 %v120, %v482
    %v484 = vpop.f32.mrf.mxu0
    %v485 = vadd.f32 %v116, %v484
    %v486 = vpop.f32.mrf.mxu0
    %v487 = vadd.f32 %v120, %v486
    %488 = vmatprep.mubr.bf16.mxu0 0
    %489 = vmatmul.mubr.bf16.gmra.mxu0 %v158
    %v490 = vpop.f32.mrf.mxu0
    %v491 = vadd.f32 %v116, %v490
    %v492 = vpop.f32.mrf.mxu0
    %v493 = vadd.f32 %v120, %v492
    %v494 = vpop.f32.mrf.mxu0
    %v495 = vadd.f32 %v116, %v494
    %v496 = vpop.f32.mrf.mxu0
    %v497 = vadd.f32 %v120, %v496
    %498 = vmatprep.mubr.bf16.mxu0 0
    %499 = vmatmul.mubr.bf16.gmra.mxu0 %v159
    %v500 = vpop.f32.mrf.mxu0
    %v501 = vadd.f32 %v116, %v500
    %v502 = vpop.f32.mrf.mxu0
    %v503 = vadd.f32 %v120, %v502
    %v504 = vpop.f32.mrf.mxu0
    %v505 = vadd.f32 %v116, %v504
    %v506 = vpop.f32.mrf.mxu0
    %v507 = vadd.f32 %v120, %v506
    %508 = vmatprep.mubr.bf16.mxu0 0
    %509 = vmatmul.mubr.bf16.gmra.mxu0 %v160
    %v510 = vpop.f32.mrf.mxu0
    %v511 = vadd.f32 %v116, %v510
    %v512 = vpop.f32.mrf.mxu0
    %v513 = vadd.f32 %v120, %v512
    %v514 = vpop.f32.mrf.mxu0
    %v515 = vadd.f32 %v116, %v514
    %v516 = vpop.f32.mrf.mxu0
    %v517 = vadd.f32 %v120, %v516
    %518 = vmatprep.mubr.bf16.mxu0 0
    %519 = vmatmul.mubr.bf16.gmra.mxu0 %v161
    %v520 = vpop.f32.mrf.mxu0
    %v521 = vadd.f32 %v116, %v520
    %v522 = vpop.f32.mrf.mxu0
    %v523 = vadd.f32 %v120, %v522
    %v524 = vpop.f32.mrf.mxu0
    %v525 = vadd.f32 %v116, %v524
    %v526 = vpop.f32.mrf.mxu0
    %v527 = vadd.f32 %v120, %v526
    %528 = vmatprep.mubr.bf16.mxu0 0
    %529 = vmatmul.mubr.bf16.gmra.mxu0 %v162
    %v530 = vpop.f32.mrf.mxu0
    %v531 = vadd.f32 %v116, %v530
    %v532 = vpop.f32.mrf.mxu0
    %v533 = vadd.f32 %v120, %v532
    %v534 = vpop.f32.mrf.mxu0
    %v535 = vadd.f32 %v116, %v534
    %v536 = vpop.f32.mrf.mxu0
    %v537 = vadd.f32 %v120, %v536
    %538 = vmatprep.mubr.bf16.mxu0 0
    %539 = vmatmul.mubr.bf16.gmra.mxu0 %v163
    %v540 = vpop.f32.mrf.mxu0
    %v541 = vadd.f32 %v116, %v540
    %v542 = vpop.f32.mrf.mxu0
    %v543 = vadd.f32 %v120, %v542
    %v544 = vpop.f32.mrf.mxu0
    %v545 = vadd.f32 %v116, %v544
    %v546 = vpop.f32.mrf.mxu0
    %v547 = vadd.f32 %v120, %v546
    %548 = vmatprep.mubr.bf16.mxu0 0
    %549 = vmatmul.mubr.bf16.gmra.mxu0 %v164
    %v550 = vpop.f32.mrf.mxu0
    %v551 = vadd.f32 %v116, %v550
    %v552 = vpop.f32.mrf.mxu0
    %v553 = vadd.f32 %v120, %v552
    %v554 = vpop.f32.mrf.mxu0
    %v555 = vadd.f32 %v116, %v554
    %v556 = vpop.f32.mrf.mxu0
    %v557 = vadd.f32 %v120, %v556
    %558 = vdwg.mxu0
    %559 = vst [vmem:[#allocation8] sm:$0xff] %v368
    %560 = vst [vmem:[#allocation8 + $0x8] sm:$0xff] %v370
    %561 = vst [vmem:[#allocation8 + $0x10] sm:$0xff] %v481
    %562 = vst [vmem:[#allocation8 + $0x18] sm:$0xff] %v483
    %563 = vst [vmem:[#allocation8 + $0x20] sm:$0xff] %v372
    %564 = vst [vmem:[#allocation8 + $0x28] sm:$0xff] %v374
    %565 = vst [vmem:[#allocation8 + $0x30] sm:$0xff] %v485
    %566 = vst [vmem:[#allocation8 + $0x38] sm:$0xff] %v487
    %567 = vst [vmem:[#allocation8 + $0x40] sm:$0xff] %v378
    %568 = vst [vmem:[#allocation8 + $0x48] sm:$0xff] %v380
    %569 = vst [vmem:[#allocation8 + $0x50] sm:$0xff] %v491
    %570 = vst [vmem:[#allocation8 + $0x58] sm:$0xff] %v493
    %571 = vst [vmem:[#allocation8 + $0x60] sm:$0xff] %v382
    %572 = vst [vmem:[#allocation8 + $0x68] sm:$0xff] %v384
    %573 = vst [vmem:[#allocation8 + $0x70] sm:$0xff] %v495
    %574 = vst [vmem:[#allocation8 + $0x78] sm:$0xff] %v497
    %575 = vst [vmem:[#allocation8 + $0x80] sm:$0xff] %v388
    %576 = vst [vmem:[#allocation8 + $0x88] sm:$0xff] %v390
    %577 = vst [vmem:[#allocation8 + $0x90] sm:$0xff] %v501
    %578 = vst [vmem:[#allocation8 + $0x98] sm:$0xff] %v503
    %579 = vst [vmem:[#allocation8 + $0xa0] sm:$0xff] %v392
    %580 = vst [vmem:[#allocation8 + $0xa8] sm:$0xff] %v394
    %581 = vst [vmem:[#allocation8 + $0xb0] sm:$0xff] %v505
    %582 = vst [vmem:[#allocation8 + $0xb8] sm:$0xff] %v507
    %583 = vst [vmem:[#allocation8 + $0xc0] sm:$0xff] %v398
    %584 = vst [vmem:[#allocation8 + $0xc8] sm:$0xff] %v400
    %585 = vst [vmem:[#allocation8 + $0xd0] sm:$0xff] %v511
    %586 = vst [vmem:[#allocation8 + $0xd8] sm:$0xff] %v513
    %587 = vst [vmem:[#allocation8 + $0xe0] sm:$0xff] %v402
    %588 = vst [vmem:[#allocation8 + $0xe8] sm:$0xff] %v404
    %589 = vst [vmem:[#allocation8 + $0xf0] sm:$0xff] %v515
    %590 = vst [vmem:[#allocation8 + $0xf8] sm:$0xff] %v517
    %591 = vst [vmem:[#allocation8 + $0x100] sm:$0xff] %v408
    %592 = vst [vmem:[#allocation8 + $0x108] sm:$0xff] %v410
    %593 = vst [vmem:[#allocation8 + $0x110] sm:$0xff] %v521
    %594 = vst [vmem:[#allocation8 + $0x118] sm:$0xff] %v523
    %595 = vst [vmem:[#allocation8 + $0x120] sm:$0xff] %v412
    %596 = vst [vmem:[#allocation8 + $0x128] sm:$0xff] %v414
    %597 = vst [vmem:[#allocation8 + $0x130] sm:$0xff] %v525
    %598 = vst [vmem:[#allocation8 + $0x138] sm:$0xff] %v527
    %599 = vst [vmem:[#allocation8 + $0x140] sm:$0xff] %v418
    %600 = vst [vmem:[#allocation8 + $0x148] sm:$0xff] %v420
    %601 = vst [vmem:[#allocation8 + $0x150] sm:$0xff] %v531
    %602 = vst [vmem:[#allocation8 + $0x158] sm:$0xff] %v533
    %603 = vst [vmem:[#allocation8 + $0x160] sm:$0xff] %v422
    %604 = vst [vmem:[#allocation8 + $0x168] sm:$0xff] %v424
    %605 = vst [vmem:[#allocation8 + $0x170] sm:$0xff] %v535
    %606 = vst [vmem:[#allocation8 + $0x178] sm:$0xff] %v537
    %607 = vst [vmem:[#allocation8 + $0x180] sm:$0xff] %v428
    %608 = vst [vmem:[#allocation8 + $0x188] sm:$0xff] %v430
    %609 = vst [vmem:[#allocation8 + $0x190] sm:$0xff] %v541
    %610 = vst [vmem:[#allocation8 + $0x198] sm:$0xff] %v543
    %611 = vst [vmem:[#allocation8 + $0x1a0] sm:$0xff] %v432
    %612 = vst [vmem:[#allocation8 + $0x1a8] sm:$0xff] %v434
    %613 = vst [vmem:[#allocation8 + $0x1b0] sm:$0xff] %v545
    %614 = vst [vmem:[#allocation8 + $0x1b8] sm:$0xff] %v547
    %615 = vst [vmem:[#allocation8 + $0x1c0] sm:$0xff] %v438
    %616 = vst [vmem:[#allocation8 + $0x1c8] sm:$0xff] %v440
    %617 = vst [vmem:[#allocation8 + $0x1d0] sm:$0xff] %v551
    %618 = vst [vmem:[#allocation8 + $0x1d8] sm:$0xff] %v553
    %619 = vst [vmem:[#allocation8 + $0x1e0] sm:$0xff] %v442
    %620 = vst [vmem:[#allocation8 + $0x1e8] sm:$0xff] %v444
    %621 = vst [vmem:[#allocation8 + $0x1f0] sm:$0xff] %v555
    %622 = vst [vmem:[#allocation8 + $0x1f8] sm:$0xff] %v557
    // Predicated region
    $region26: #{tpu_custom_call.1} parent=1 // pred_check
      _
    $region27: #{tpu_custom_call.1} parent=1 // pred_check_branch
      %624 = sbr.rel (0) target = $region29
    $region28: #{tpu_custom_call.1} parent=1 // pred_region
      %s626 = ssub.s32 8192, 8192
      %627 = vsyncadd [#allocation4], %s626
      %s628 = sshll.u32 [#allocation8], 4
      %s629 = int_to_ptr.vmem [resolvable:$true] %s628
      %634 = dma.vmem_to_hbm [thread:$0]  %s629, 8192, %s3, [#allocation4], 512, 512, 32
    $region29: #{tpu_custom_call.1} parent=1 // pred_fallthru
      _
    // Predicated region
    $region30: #{tpu_custom_call.1} parent=1 // pred_check
      _
    $region31: #{tpu_custom_call.1} parent=1 // pred_check_branch
      %636 = sbr.rel (0) target = $region33
    $region32: #{tpu_custom_call.1} parent=1 // pred_region
      %637 = dma.done [#allocation4], 8192
    $region33: #{tpu_custom_call.1} parent=1 // pred_fallthru
      _
    %638 = vsyncpa [#allocation3], 1
    %639 = vsyncpa [#allocation6], 1
    %640 = vsyncpa [#allocation4], 1

</llo_original>
